<compile_context>
chip_gen: v7x
topology: tpu7x:2x2x1
jax: 0.10.0
libtpu: 0.0.40
codegen_flags: <defaults>
</compile_context>

<pallas_src>
import functools

import jax
import jax.numpy as jnp
from jax.experimental import pallas as pl
from jax.experimental.pallas import tpu as pltpu


# ----------------------------- Pallas kernel -----------------------------

def _sigmoid_exact(v):
    # Exact logistic: exp(-v) -> inf for very negative v gives 1/(1+inf) = 0.
    return 1.0 / (1.0 + jnp.exp(-v))


def _se_kernel(x_ref, w1t_ref, b1_ref, w2_ref, b2_ref, o_ref, *, inv_hw):
    # x_ref block: (Nb, C, HWp) -- channels on sublanes, spatial on lanes.

    # Global average pool over the spatial (lane) axis, accumulated in f32.
    pooled = jnp.sum(x_ref[...].astype(jnp.float32), axis=2) * inv_hw   # (Nb, C)

    # fc1 (C -> Csq): VPU broadcast-multiply + XLU sublane reduce (tiny).
    w1t = w1t_ref[...]                                                  # (C, Csq)
    s1 = jnp.sum(pooled[:, :, None] * w1t[None, :, :], axis=1)          # (Nb, Csq)
    s1 = s1 + b1_ref[...]                                               # + (1, Csq)
    s1 = s1 * _sigmoid_exact(s1)                                        # SiLU

    # fc2 (Csq -> C): same trick (tiny).
    w2 = w2_ref[...]                                                    # (C, Csq)
    s2 = jnp.sum(s1[:, None, :] * w2[None, :, :], axis=2)               # (Nb, C)
    s2 = _sigmoid_exact(s2 + b2_ref[...])                               # sigmoid

    # Scale the full activation; re-read x_ref so the pooled-stage load is not
    # kept live across the FC stage (bounded register pressure on big blocks).
    o_ref[...] = (x_ref[...].astype(jnp.float32)
                  * s2[:, :, None]).astype(o_ref.dtype)


# ----------------------------- wrapper -----------------------------

def squeeze_excitation_forward(x_nchw, p, *, target_block_bytes=2 << 20):
    N, C, H, W = x_nchw.shape
    HW = H * W
    HWp = ((HW + 127) // 128) * 128          # lane-dense (unmasked) stores

    x = x_nchw.reshape(N, C, HW)             # contiguous reshape, no relayout
    if HWp != HW:
        x = jnp.pad(x, ((0, 0), (0, 0), (0, HWp - HW)))

    w1t = jnp.asarray(p["w1"]).T             # (Csq, C) -> (C, Csq)
    w2 = jnp.asarray(p["w2"])                # (C, Csq) natural Conv2d layout
    Csq = w1t.shape[1]
    b1 = p["b1"].reshape(1, Csq)
    b2 = p["b2"].reshape(1, C)

    # --- batch folding: size each block toward target_block_bytes, but keep
    # at least 2 grid steps when N allows (v7x has 2 TensorCores per chip). ---
    itemsize = jnp.dtype(x.dtype).itemsize
    per_sample = C * HWp * itemsize
    nb = int(max(1, min(N, target_block_bytes // per_sample)))
    if N >= 2:
        nb = max(1, min(nb, N // 2))
    while N % nb:                            # avoid padded edge blocks
        nb -= 1
    grid = N // nb

    # in + out double-buffered blocks plus slack; safe on v5e/v6e/v7x.
    block_bytes = nb * per_sample
    vmem_limit = int(min(max(4 * block_bytes + (4 << 20), 16 << 20), 48 << 20))

    out = pl.pallas_call(
        functools.partial(_se_kernel, inv_hw=1.0 / HW),
        out_shape=jax.ShapeDtypeStruct((N, C, HWp), x.dtype),
        grid=(grid,),
        in_specs=[
            pl.BlockSpec((nb, C, HWp), lambda i: (i, 0, 0)),
            # Constant index maps: params are DMA'd once, not per grid step.
            pl.BlockSpec((C, Csq), lambda i: (0, 0)),
            pl.BlockSpec((1, Csq), lambda i: (0, 0)),
            pl.BlockSpec((C, Csq), lambda i: (0, 0)),
            pl.BlockSpec((1, C), lambda i: (0, 0)),
        ],
        out_specs=pl.BlockSpec((nb, C, HWp), lambda i: (i, 0, 0)),
        compiler_params=pltpu.CompilerParams(
            dimension_semantics=("parallel",),
            vmem_limit_bytes=vmem_limit),
    )(x, w1t, b1, w2, b2)

    if HWp != HW:
        out = out[:, :, :HW]
    return out.reshape(N, C, H, W)


# ----------------------------- params & reference -----------------------------

def make_params(key, expand_c, squeeze_c):
    k1, k2, k3, k4 = jax.random.split(key, 4)
    return dict(
        # torch.nn.Conv2d(expand_c, squeeze_c, 1) weight: (squeeze_c, expand_c)
        w1=0.2 * jax.random.normal(k1, (squeeze_c, expand_c), jnp.float32),
        b1=0.1 * jax.random.normal(k2, (squeeze_c,), jnp.float32),
        # torch.nn.Conv2d(squeeze_c, expand_c, 1) weight: (expand_c, squeeze_c)
        w2=0.2 * jax.random.normal(k3, (expand_c, squeeze_c), jnp.float32),
        b2=0.1 * jax.random.normal(k4, (expand_c,), jnp.float32),
    )


def reference_forward(x, p):
    # Pure-JAX reference with exact sigmoid/SiLU.
    pooled = jnp.mean(x.astype(jnp.float32), axis=(2, 3))   # (N, C)
    s = pooled @ p["w1"].T + p["b1"]                         # (N, Csq)
    s = s * jax.nn.sigmoid(s)                                # SiLU
    s = jax.nn.sigmoid(s @ p["w2"].T + p["b2"])              # (N, C)
    return (s[:, :, None, None] * x.astype(jnp.float32)).astype(x.dtype)


if __name__ == "__main__":
    key = jax.random.PRNGKey(0)
    kx, kp, kx2 = jax.random.split(key, 3)

    # SqueezeExcitation(input_c=8, expand_c=32, squeeze_factor=4) -> squeeze_c=2
    N, H, W = 2, 16, 16
    input_c, expand_c = 8, 32
    squeeze_c = input_c // 4

    x = jax.random.normal(kx, (N, expand_c, H, W), jnp.float32)
    params = make_params(kp, expand_c, squeeze_c)

    out = jax.block_until_ready(squeeze_excitation_forward(x, params))
    ref = jax.block_until_ready(reference_forward(x, params))
    assert out.shape == (N, expand_c, H, W), out.shape
    err = float(jnp.max(jnp.abs(out - ref)))
    assert jnp.allclose(out, ref, rtol=1e-4, atol=1e-4), err

    # Secondary check: non-multiple-of-128 spatial size (7x7) exercises the
    # lane-padding path and a grid of 3 steps.
    x2 = jax.random.normal(kx2, (3, expand_c, 7, 7), jnp.float32)
    out2 = jax.block_until_ready(squeeze_excitation_forward(x2, params))
    ref2 = jax.block_until_ready(reference_forward(x2, params))
    err2 = float(jnp.max(jnp.abs(out2 - ref2)))
    assert jnp.allclose(out2, ref2, rtol=1e-4, atol=1e-4), err2

    print("KERNEL_OK")
</pallas_src>

<mosaic_0001>
module attributes {stable_mosaic.version = 11 : i64} {
  func.func @_se_kernel(%arg0: i32, %arg1: memref<1x32x256xf32, #tpu.memory_space<vmem>>, %arg2: memref<32x2xf32, #tpu.memory_space<vmem>>, %arg3: memref<1x2xf32, #tpu.memory_space<vmem>>, %arg4: memref<32x2xf32, #tpu.memory_space<vmem>>, %arg5: memref<1x32xf32, #tpu.memory_space<vmem>>, %arg6: memref<1x32x256xf32, #tpu.memory_space<vmem>>) attributes {dimension_semantics = [#tpu.dimension_semantics<parallel>], iteration_bounds = array<i64: 2>, scalar_prefetch = 0 : i64, scratch_operands = 0 : i64, tpu.core_type = #tpu.core_type<tc>, window_params = [{transform_indices = @transform_0, window_bounds = array<i64: 1, 32, 256>}, {pipeline_mode = #tpu.pipeline_mode<synchronous>, transform_indices = @transform_1, window_bounds = array<i64: 32, 2>}, {pipeline_mode = #tpu.pipeline_mode<synchronous>, transform_indices = @transform_2, window_bounds = array<i64: 1, 2>}, {pipeline_mode = #tpu.pipeline_mode<synchronous>, transform_indices = @transform_3, window_bounds = array<i64: 32, 2>}, {pipeline_mode = #tpu.pipeline_mode<synchronous>, transform_indices = @transform_4, window_bounds = array<i64: 1, 32>}, {transform_indices = @transform_5, window_bounds = array<i64: 1, 32, 256>}]} {
    %c0 = arith.constant 0 : index
    %c0_0 = arith.constant 0 : index
    %c0_1 = arith.constant 0 : index
    %0 = vector.load %arg1[%c0, %c0_0, %c0_1] : memref<1x32x256xf32, #tpu.memory_space<vmem>>, vector<1x32x256xf32>
    %cst = arith.constant dense<0.000000e+00> : vector<1x32xf32>
    %1 = vector.multi_reduction <add>, %0, %cst [2] : vector<1x32x256xf32> to vector<1x32xf32>
    %cst_2 = arith.constant 3.906250e-03 : f32
    %2 = vector.broadcast %cst_2 : f32 to vector<1x32xf32>
    %3 = arith.mulf %1, %2 : vector<1x32xf32>
    %c0_3 = arith.constant 0 : index
    %c0_4 = arith.constant 0 : index
    %4 = vector.load %arg2[%c0_3, %c0_4] : memref<32x2xf32, #tpu.memory_space<vmem>>, vector<32x2xf32>
    %5 = vector.shape_cast %3 : vector<1x32xf32> to vector<1x32x1xf32>
    %6 = vector.shape_cast %4 : vector<32x2xf32> to vector<1x32x2xf32>
    %7 = vector.broadcast %5 : vector<1x32x1xf32> to vector<1x32x2xf32>
    %8 = arith.mulf %7, %6 : vector<1x32x2xf32>
    %cst_5 = arith.constant dense<0.000000e+00> : vector<1x2xf32>
    %9 = vector.multi_reduction <add>, %8, %cst_5 [1] : vector<1x32x2xf32> to vector<1x2xf32>
    %c0_6 = arith.constant 0 : index
    %c0_7 = arith.constant 0 : index
    %10 = vector.load %arg3[%c0_6, %c0_7] : memref<1x2xf32, #tpu.memory_space<vmem>>, vector<1x2xf32>
    %11 = arith.addf %9, %10 : vector<1x2xf32>
    %cst_8 = arith.constant 0.000000e+00 : f32
    %12 = vector.broadcast %cst_8 : f32 to vector<1x2xf32>
    %13 = arith.subf %12, %11 : vector<1x2xf32>
    %14 = math.exp %13 : vector<1x2xf32>
    %cst_9 = arith.constant 1.000000e+00 : f32
    %15 = vector.broadcast %cst_9 : f32 to vector<1x2xf32>
    %16 = arith.addf %15, %14 : vector<1x2xf32>
    %cst_10 = arith.constant 1.000000e+00 : f32
    %17 = vector.broadcast %cst_10 : f32 to vector<1x2xf32>
    %18 = arith.divf %17, %16 : vector<1x2xf32>
    %19 = arith.mulf %11, %18 : vector<1x2xf32>
    %c0_11 = arith.constant 0 : index
    %c0_12 = arith.constant 0 : index
    %20 = vector.load %arg4[%c0_11, %c0_12] : memref<32x2xf32, #tpu.memory_space<vmem>>, vector<32x2xf32>
    %21 = vector.shape_cast %19 : vector<1x2xf32> to vector<1x1x2xf32>
    %22 = vector.shape_cast %20 : vector<32x2xf32> to vector<1x32x2xf32>
    %23 = vector.broadcast %21 : vector<1x1x2xf32> to vector<1x32x2xf32>
    %24 = arith.mulf %23, %22 : vector<1x32x2xf32>
    %cst_13 = arith.constant dense<0.000000e+00> : vector<1x32xf32>
    %25 = vector.multi_reduction <add>, %24, %cst_13 [2] : vector<1x32x2xf32> to vector<1x32xf32>
    %c0_14 = arith.constant 0 : index
    %c0_15 = arith.constant 0 : index
    %26 = vector.load %arg5[%c0_14, %c0_15] : memref<1x32xf32, #tpu.memory_space<vmem>>, vector<1x32xf32>
    %27 = arith.addf %25, %26 : vector<1x32xf32>
    %cst_16 = arith.constant 0.000000e+00 : f32
    %28 = vector.broadcast %cst_16 : f32 to vector<1x32xf32>
    %29 = arith.subf %28, %27 : vector<1x32xf32>
    %30 = math.exp %29 : vector<1x32xf32>
    %cst_17 = arith.constant 1.000000e+00 : f32
    %31 = vector.broadcast %cst_17 : f32 to vector<1x32xf32>
    %32 = arith.addf %31, %30 : vector<1x32xf32>
    %cst_18 = arith.constant 1.000000e+00 : f32
    %33 = vector.broadcast %cst_18 : f32 to vector<1x32xf32>
    %34 = arith.divf %33, %32 : vector<1x32xf32>
    %c0_19 = arith.constant 0 : index
    %c0_20 = arith.constant 0 : index
    %c0_21 = arith.constant 0 : index
    %35 = vector.load %arg1[%c0_19, %c0_20, %c0_21] : memref<1x32x256xf32, #tpu.memory_space<vmem>>, vector<1x32x256xf32>
    %36 = vector.shape_cast %34 : vector<1x32xf32> to vector<1x32x1xf32>
    %37 = vector.broadcast %36 : vector<1x32x1xf32> to vector<1x32x256xf32>
    %38 = arith.mulf %35, %37 : vector<1x32x256xf32>
    %c0_22 = arith.constant 0 : index
    %c0_23 = arith.constant 0 : index
    %c0_24 = arith.constant 0 : index
    %39 = vector.load %arg6[%c0_22, %c0_23, %c0_24] : memref<1x32x256xf32, #tpu.memory_space<vmem>>, vector<1x32x256xf32>
    tpu.vector_store %arg6[%c0_22, %c0_23, %c0_24], %38 {strides = array<i32>} : memref<1x32x256xf32, #tpu.memory_space<vmem>>, vector<1x32x256xf32>,
    return
  }
  func.func @transform_0(%arg0: i32) -> (i32, i32, i32) {
    %c0_i32 = arith.constant 0 : i32
    %c0_i32_0 = arith.constant 0 : i32
    %c0_i32_1 = arith.constant 0 : i32
    return %arg0, %c0_i32, %c0_i32_0 : i32, i32, i32
  }
  func.func @transform_1(%arg0: i32) -> (i32, i32) {
    %c0_i32 = arith.constant 0 : i32
    %c0_i32_0 = arith.constant 0 : i32
    %c0_i32_1 = arith.constant 0 : i32
    return %c0_i32, %c0_i32_0 : i32, i32
  }
  func.func @transform_2(%arg0: i32) -> (i32, i32) {
    %c0_i32 = arith.constant 0 : i32
    %c0_i32_0 = arith.constant 0 : i32
    %c0_i32_1 = arith.constant 0 : i32
    return %c0_i32, %c0_i32_0 : i32, i32
  }
  func.func @transform_3(%arg0: i32) -> (i32, i32) {
    %c0_i32 = arith.constant 0 : i32
    %c0_i32_0 = arith.constant 0 : i32
    %c0_i32_1 = arith.constant 0 : i32
    return %c0_i32, %c0_i32_0 : i32, i32
  }
  func.func @transform_4(%arg0: i32) -> (i32, i32) {
    %c0_i32 = arith.constant 0 : i32
    %c0_i32_0 = arith.constant 0 : i32
    %c0_i32_1 = arith.constant 0 : i32
    return %c0_i32, %c0_i32_0 : i32, i32
  }
  func.func @transform_5(%arg0: i32) -> (i32, i32, i32) {
    %c0_i32 = arith.constant 0 : i32
    %c0_i32_0 = arith.constant 0 : i32
    %c0_i32_1 = arith.constant 0 : i32
    return %arg0, %c0_i32, %c0_i32_0 : i32, i32, i32
  }
}

</mosaic_0001>

<llo_original>
// kernel: tpu_custom_call.1
$region0: #{tpu_custom_call.1}
  #allocation0 [shape = 'u32[]', space=smem, size = 0x4, offset = 0x4, fixed_abs, tag = 'smem constant byte address 0x4 - core index']
  #allocation1 [shape = 'u32[144,128]{1,0:T(1,128)}', space=vmem, size = 0x12000, scoped, tag = 'internal scratch']
  %s0 = inlined_call_operand.hbm [shape: f32[2,32,256], index: 0, kind: input, shape index: {}]
  %s1 = inlined_call_operand.vmem [shape: f32[32,2], index: 1, kind: input, shape index: {}]
  %s2 = inlined_call_operand.vmem [shape: f32[1,2], index: 2, kind: input, shape index: {}]
  %s3 = inlined_call_operand.vmem [shape: f32[32,2], index: 3, kind: input, shape index: {}]
  %s4 = inlined_call_operand.vmem [shape: f32[1,32], index: 4, kind: input, shape index: {}]
  %s5 = inlined_call_operand.hbm [shape: f32[2,32,256], index: 5, kind: output, shape index: {}]
  %s6 = sld [smem:[#allocation0]]
  $region57: #{tpu_custom_call.1} parent=0
    _
  %s8 = ssub.s32 1, %s6
  %s9 = scalar_select 0, %s8, %s6
  $region1: #{tpu_custom_call.1} parent=0
    #allocation2 [shape = 'u8[65536]{0}', space=vmem, size = 0x10000, scoped, tag = 'input window, operand 0']
    #allocation3 [shape = 's32[2]{0}', space=sflag, size = 0x8, scoped, tag = 'scoped memory for tpu_custom_call.1']
    #allocation4 [shape = 's32[2]{0}', space=sflag, size = 0x8, scoped, tag = 'scoped memory for tpu_custom_call.1']
    #allocation5 [shape = 'u8[65536]{0}', space=vmem, size = 0x10000, scoped, tag = 'output window, operand 0']
    %10 = vsyncpa [#allocation3], 0
    %s11 = scalar_lea.sflag [#allocation3], 1
    %12 = vsyncpa %s11, 0
    %13 = vsyncpa [#allocation4], 0
    %s14 = scalar_lea.sflag [#allocation4], 1
    %15 = vsyncpa %s14, 0
    loop: start=0, step=1, limit=4
    $region2: #{tpu_custom_call.1} parent=1 // loop_pre_header
      _
    $region3: #{tpu_custom_call.1} parent=1 // loop_header
      %s17 = sphi 0, %s21
      %p18 = scmp.ge.s32.totalorder %s17, 4
      %s27 = sphi 0, %s29
      %s30 = sphi 0, %s27
      %s31 = sphi 0, %s30
      %s47 = sphi 0, %s31
      %s51 = sphi 0, %s51
      %s53 = sphi 0, %s51
      %s54 = sphi 0, %s53
      %s68 = sphi 0, %s54
      %s72 = sphi 0, %s72
      %s74 = sphi 0, %s72
      %s75 = sphi 0, %s74
      %s89 = sphi 0, %s75
      %s93 = sphi 0, %s93
      %s95 = sphi 0, %s93
      %s96 = sphi 0, %s95
      %s110 = sphi 0, %s96
      %s114 = sphi 0, %s114
      %s116 = sphi 0, %s114
      %s117 = sphi 0, %s116
      %s131 = sphi 0, %s117
      %s137 = sphi 0, %s139
      %s140 = sphi 0, %s137
      %s141 = sphi 0, %s140
      %s157 = sphi 0, %s141
    $region4: #{tpu_custom_call.1} parent=1 // loop_header_branch
      %20 = sbr.rel (%p18) target = $region8
    $region5: #{tpu_custom_call.1} parent=1 // loop_body
      %s22 = ssub.s32 %s17, 1
      %s23 = ssub.s32 %s17, 2
      %s24 = sadd.s32 %s17, 1
      %s25 = ssub.s32 %s17, %s24
      %p26 = scmp.eq.s32.totalorder %s25, 0
      %s28 = sadd.s32 %s27, 1
      %s29 = scalar_select %p26, %s27, %s28
      %p32 = pneg %p26
      %p33 = scmp.eq.s32.totalorder %s17, 1
      %p34 = por %p32, %p33
      %p35 = scmp.ne.s32.totalorder %s27, %s30
      %p36 = scmp.eq.s32.totalorder %s17, 0
      %p37 = por %p35, %p36
      %p38 = scmp.ne.s32.totalorder %s27, %s30
      %p39 = scmp.eq.s32.totalorder %s22, 1
      %p40 = por %p38, %p39
      %p41 = scmp.ne.s32.totalorder %s30, %s31
      %p42 = scmp.eq.s32.totalorder %s22, 0
      %p43 = por %p41, %p42
      %p44 = scmp.ne.s32.totalorder %s30, %s31
      %p45 = scmp.eq.s32.totalorder %s23, 1
      %p46 = por %p44, %p45
      %p48 = scmp.ne.s32.totalorder %s31, %s47
      %p49 = scmp.eq.s32.totalorder %s23, 0
      %p50 = por %p48, %p49
      %s52 = sadd.s32 %s51, 1
      %p55 = scmp.eq.s32.totalorder %s17, 1
      %p56 = scmp.ne.s32.totalorder %s51, %s53
      %p57 = scmp.eq.s32.totalorder %s17, 0
      %p58 = por %p56, %p57
      %p59 = scmp.ne.s32.totalorder %s51, %s53
      %p60 = scmp.eq.s32.totalorder %s22, 1
      %p61 = por %p59, %p60
      %p62 = scmp.ne.s32.totalorder %s53, %s54
      %p63 = scmp.eq.s32.totalorder %s22, 0
      %p64 = por %p62, %p63
      %p65 = scmp.ne.s32.totalorder %s53, %s54
      %p66 = scmp.eq.s32.totalorder %s23, 1
      %p67 = por %p65, %p66
      %p69 = scmp.ne.s32.totalorder %s54, %s68
      %p70 = scmp.eq.s32.totalorder %s23, 0
      %p71 = por %p69, %p70
      %s73 = sadd.s32 %s72, 1
      %p76 = scmp.eq.s32.totalorder %s17, 1
      %p77 = scmp.ne.s32.totalorder %s72, %s74
      %p78 = scmp.eq.s32.totalorder %s17, 0
      %p79 = por %p77, %p78
      %p80 = scmp.ne.s32.totalorder %s72, %s74
      %p81 = scmp.eq.s32.totalorder %s22, 1
      %p82 = por %p80, %p81
      %p83 = scmp.ne.s32.totalorder %s74, %s75
      %p84 = scmp.eq.s32.totalorder %s22, 0
      %p85 = por %p83, %p84
      %p86 = scmp.ne.s32.totalorder %s74, %s75
      %p87 = scmp.eq.s32.totalorder %s23, 1
      %p88 = por %p86, %p87
      %p90 = scmp.ne.s32.totalorder %s75, %s89
      %p91 = scmp.eq.s32.totalorder %s23, 0
      %p92 = por %p90, %p91
      %s94 = sadd.s32 %s93, 1
      %p97 = scmp.eq.s32.totalorder %s17, 1
      %p98 = scmp.ne.s32.totalorder %s93, %s95
      %p99 = scmp.eq.s32.totalorder %s17, 0
      %p100 = por %p98, %p99
      %p101 = scmp.ne.s32.totalorder %s93, %s95
      %p102 = scmp.eq.s32.totalorder %s22, 1
      %p103 = por %p101, %p102
      %p104 = scmp.ne.s32.totalorder %s95, %s96
      %p105 = scmp.eq.s32.totalorder %s22, 0
      %p106 = por %p104, %p105
      %p107 = scmp.ne.s32.totalorder %s95, %s96
      %p108 = scmp.eq.s32.totalorder %s23, 1
      %p109 = por %p107, %p108
      %p111 = scmp.ne.s32.totalorder %s96, %s110
      %p112 = scmp.eq.s32.totalorder %s23, 0
      %p113 = por %p111, %p112
      %s115 = sadd.s32 %s114, 1
      %p118 = scmp.eq.s32.totalorder %s17, 1
      %p119 = scmp.ne.s32.totalorder %s114, %s116
      %p120 = scmp.eq.s32.totalorder %s17, 0
      %p121 = por %p119, %p120
      %p122 = scmp.ne.s32.totalorder %s114, %s116
      %p123 = scmp.eq.s32.totalorder %s22, 1
      %p124 = por %p122, %p123
      %p125 = scmp.ne.s32.totalorder %s116, %s117
      %p126 = scmp.eq.s32.totalorder %s22, 0
      %p127 = por %p125, %p126
      %p128 = scmp.ne.s32.totalorder %s116, %s117
      %p129 = scmp.eq.s32.totalorder %s23, 1
      %p130 = por %p128, %p129
      %p132 = scmp.ne.s32.totalorder %s117, %s131
      %p133 = scmp.eq.s32.totalorder %s23, 0
      %p134 = por %p132, %p133
      %s135 = ssub.s32 %s17, %s24
      %p136 = scmp.eq.s32.totalorder %s135, 0
      %s138 = sadd.s32 %s137, 1
      %s139 = scalar_select %p136, %s137, %s138
      %p142 = pneg %p136
      %p143 = scmp.eq.s32.totalorder %s17, 1
      %p144 = por %p142, %p143
      %p145 = scmp.ne.s32.totalorder %s137, %s140
      %p146 = scmp.eq.s32.totalorder %s17, 0
      %p147 = por %p145, %p146
      %p148 = scmp.ne.s32.totalorder %s137, %s140
      %p149 = scmp.eq.s32.totalorder %s22, 1
      %p150 = por %p148, %p149
      %p151 = scmp.ne.s32.totalorder %s140, %s141
      %p152 = scmp.eq.s32.totalorder %s22, 0
      %p153 = por %p151, %p152
      %p154 = scmp.ne.s32.totalorder %s140, %s141
      %p155 = scmp.eq.s32.totalorder %s23, 1
      %p156 = por %p154, %p155
      %p158 = scmp.ne.s32.totalorder %s141, %s157
      %p159 = scmp.eq.s32.totalorder %s23, 0
      %p160 = por %p158, %p159
      %p161 = scmp.le.s32.totalorder 1, %s17
      %p162 = scmp.lt.s32.totalorder %s17, 3
      %p163 = pnand %p161, %p162
      %p164 = pneg %p163
      // Predicated region
      $region9: #{tpu_custom_call.1} parent=5 // pred_check
        _
      $region10: #{tpu_custom_call.1} parent=5 // pred_check_branch
        %166 = sbr.rel (%p163) target = $region12
      $region11: #{tpu_custom_call.1} parent=5 // pred_region
        %s167 = ssub.s32 %s17, 1
        // Predicated region
        $region13: #{tpu_custom_call.1} parent=11 // pred_check
          %p168 = pneg %p64
        $region14: #{tpu_custom_call.1} parent=11 // pred_check_branch
          %170 = sbr.rel (%p168) target = $region16
        $region15: #{tpu_custom_call.1} parent=11 // pred_region
          _
        $region16: #{tpu_custom_call.1} parent=11 // pred_fallthru
          _
        // Predicated region
        $region17: #{tpu_custom_call.1} parent=11 // pred_check
          %p171 = pneg %p85
        $region18: #{tpu_custom_call.1} parent=11 // pred_check_branch
          %173 = sbr.rel (%p171) target = $region20
        $region19: #{tpu_custom_call.1} parent=11 // pred_region
          _
        $region20: #{tpu_custom_call.1} parent=11 // pred_fallthru
          _
        // Predicated region
        $region21: #{tpu_custom_call.1} parent=11 // pred_check
          %p174 = pneg %p106
        $region22: #{tpu_custom_call.1} parent=11 // pred_check_branch
          %176 = sbr.rel (%p174) target = $region24
        $region23: #{tpu_custom_call.1} parent=11 // pred_region
          _
        $region24: #{tpu_custom_call.1} parent=11 // pred_fallthru
          _
        // Predicated region
        $region25: #{tpu_custom_call.1} parent=11 // pred_check
          %p177 = pneg %p127
        $region26: #{tpu_custom_call.1} parent=11 // pred_check_branch
          %179 = sbr.rel (%p177) target = $region28
        $region27: #{tpu_custom_call.1} parent=11 // pred_region
          _
        $region28: #{tpu_custom_call.1} parent=11 // pred_fallthru
          _
      $region12: #{tpu_custom_call.1} parent=5 // pred_fallthru
        _
      %p180 = scmp.lt.s32.totalorder %s17, 2
      // Predicated region
      $region29: #{tpu_custom_call.1} parent=5 // pred_check
        %p181 = pneg %p180
      $region30: #{tpu_custom_call.1} parent=5 // pred_check_branch
        %183 = sbr.rel (%p181) target = $region32
      $region31: #{tpu_custom_call.1} parent=5 // pred_region
        // Predicated region
        $region33: #{tpu_custom_call.1} parent=31 // pred_check
          %p184 = pneg %p37
        $region34: #{tpu_custom_call.1} parent=31 // pred_check_branch
          %186 = sbr.rel (%p184) target = $region36
        $region35: #{tpu_custom_call.1} parent=31 // pred_region
          %s187 = sand.u32 %s27, 1
          %s188 = scalar_lea.sflag [#allocation3], %s187
          %s189 = sand.u32 %s27, 1
          %s190 = smul.addr %s189, 64
          %s191 = scalar_lea.vmem [#allocation2], %s190
          %s193 = ssub.s32 1024, 1024
          %194 = vsyncadd %s188, %s193
          %s195 = smul.addr %s17, 8
          %s196 = smul.addr %s195, 128
          %s197 = scalar_lea.hbm %s0, %s196
          %s198 = sshll.u32 %s191, 4
          %s199 = int_to_ptr.vmem [resolvable:$true] %s198
          %204 = dma.hbm_to_vmem [thread:$0]  %s197, 1024, %s199, %s188, 256, 256, 16
        $region36: #{tpu_custom_call.1} parent=31 // pred_fallthru
          _
      $region32: #{tpu_custom_call.1} parent=5 // pred_fallthru
        _
      %p205 = scmp.le.s32.totalorder 1, %s17
      %p206 = scmp.lt.s32.totalorder %s17, 3
      %p207 = pnand %p205, %p206
      %p208 = pneg %p207
      // Predicated region
      $region37: #{tpu_custom_call.1} parent=5 // pred_check
        _
      $region38: #{tpu_custom_call.1} parent=5 // pred_check_branch
        %210 = sbr.rel (%p207) target = $region40
      $region39: #{tpu_custom_call.1} parent=5 // pred_region
        %s211 = ssub.s32 %s17, 1
        %s212 = sand.u32 %s30, 1
        %s213 = scalar_lea.sflag [#allocation3], %s212
        %s214 = sand.u32 %s30, 1
        %s215 = smul.addr %s214, 64
        %s216 = scalar_lea.vmem [#allocation2], %s215
        // Predicated region
        $region41: #{tpu_custom_call.1} parent=39 // pred_check
          %p217 = pneg %p43
        $region42: #{tpu_custom_call.1} parent=39 // pred_check_branch
          %219 = sbr.rel (%p217) target = $region44
        $region43: #{tpu_custom_call.1} parent=39 // pred_region
          %220 = dma.done %s213, 1024
        $region44: #{tpu_custom_call.1} parent=39 // pred_fallthru
          _
        %s221 = sand.u32 %s30, 1
        %s222 = scalar_lea.sflag [#allocation3], %s221
        %s223 = sand.u32 %s30, 1
        %s224 = smul.addr %s223, 64
        %s225 = scalar_lea.vmem [#allocation2], %s224
        %p226 = pneg %p43
        %p227 = pneg %p40
        %p228 = pneg %p64
        %p229 = pneg %p61
        %p230 = pneg %p85
        %p231 = pneg %p82
        %p232 = pneg %p106
        %p233 = pneg %p103
        %p234 = pneg %p127
        %p235 = pneg %p124
        %p236 = pneg %p153
        %p237 = pneg %p150
        %s238 = sand.u32 %s140, 1
        %s239 = scalar_lea.sflag [#allocation4], %s238
        %s240 = sand.u32 %s140, 1
        %s241 = smul.addr %s240, 64
        %s242 = scalar_lea.vmem [#allocation5], %s241
        %v243 = vld [vmem:[%s216] sm:$0xff]
        %v244 = vld [vmem:[%s216 + $0x8] sm:$0xff]
        %v245 = vld [vmem:[%s216 + $0x10] sm:$0xff]
        %v246 = vld [vmem:[%s216 + $0x18] sm:$0xff]
        %v247 = vld [vmem:[%s216 + $0x20] sm:$0xff]
        %v248 = vld [vmem:[%s216 + $0x28] sm:$0xff]
        %v249 = vld [vmem:[%s216 + $0x30] sm:$0xff]
        %v250 = vld [vmem:[%s216 + $0x38] sm:$0xff]
        %v251 = vadd.f32 %v243, %v244
        %252 = vadd.xlane.f32.xlu0 %v251
        %v253 = vpop.xlane.xlu0 %252
        %v254 = vadd.f32 %v245, %v246
        %255 = vadd.xlane.f32.xlu0 %v254
        %v256 = vpop.xlane.xlu0 %255
        %v257 = vadd.f32 %v247, %v248
        %258 = vadd.xlane.f32.xlu0 %v257
        %v259 = vpop.xlane.xlu0 %258
        %v260 = vadd.f32 %v249, %v250
        %261 = vadd.xlane.f32.xlu0 %v260
        %v262 = vpop.xlane.xlu0 %261
        %v263 = vmul.f32 %v253, 0.00390625
        %v264 = vmul.f32 %v256, 0.00390625
        %v265 = vmul.f32 %v259, 0.00390625
        %v266 = vmul.f32 %v262, 0.00390625
        %v267 = vld [vmem:[%s1] sm:$0xff]
        %v268 = vld [vmem:[%s1 + $0x8] sm:$0xff]
        %v269 = vld [vmem:[%s1 + $0x10] sm:$0xff]
        %v270 = vld [vmem:[%s1 + $0x18] sm:$0xff]
        %v271 = vmul.f32 %v263, %v267
        %v272 = vmul.f32 %v264, %v268
        %v273 = vmul.f32 %v265, %v269
        %v274 = vmul.f32 %v266, %v270
        %vm275 = vcmask 15360
        %v276 = vsel %vm275, %v271, 0.0
        %v277 = vsel %vm275, %v272, 0.0
        %v278 = vadd.f32 %v276, %v277
        %v279 = vsel %vm275, %v273, 0.0
        %v280 = vadd.f32 %v278, %v279
        %v281 = vsel %vm275, %v274, 0.0
        %v282 = vadd.f32 %v280, %v281
        %v283 = vrot.slane %v282, 4
        %v284 = vadd.f32 %v282, %v283
        %v285 = vrot.slane %v284, 2
        %v286 = vadd.f32 %v284, %v285
        %v287 = vrot.slane %v286, 1
        %v288 = vadd.f32 %v286, %v287
        %v289 = vld [vmem:[%s2] sm:$0x1]
        %v290 = vadd.f32 %v288, %v289
        %v291 = vsub.f32 0.0, %v290
        %v292 = vmul.f32 %v291, 1.442695
        %v293 = vpow.pop %v292
        %v294 = vadd.f32 %v293, 1.0
        %v295 = vrcp.pop %v294
        %v296 = vmul.f32 1.0, %v295
        %v297 = vmul.f32 %v290, %v296
        %v298 = vld [vmem:[%s3] sm:$0xff]
        %v299 = vld [vmem:[%s3 + $0x8] sm:$0xff]
        %v300 = vld [vmem:[%s3 + $0x10] sm:$0xff]
        %v301 = vld [vmem:[%s3 + $0x18] sm:$0xff]
        %v302 = vlaneseq
        %v303 = vshrl.u32 %v302, 7
        %v304 = vsub.s32 0, %v303
        %v305 = vrot.slane %v297, %v304
        %v306 = vmul.f32 %v305, %v298
        %v307 = vmul.f32 %v305, %v299
        %v308 = vmul.f32 %v305, %v300
        %v309 = vmul.f32 %v305, %v301
        %v310 = vsel %vm275, %v306, 0.0
        %311 = vadd.xlane.f32.xlu0 %v310
        %v312 = vpop.xlane.xlu0 %311
        %v313 = vsel %vm275, %v307, 0.0
        %314 = vadd.xlane.f32.xlu0 %v313
        %v315 = vpop.xlane.xlu0 %314
        %v316 = vsel %vm275, %v308, 0.0
        %317 = vadd.xlane.f32.xlu0 %v316
        %v318 = vpop.xlane.xlu0 %317
        %v319 = vsel %vm275, %v309, 0.0
        %320 = vadd.xlane.f32.xlu0 %v319
        %v321 = vpop.xlane.xlu0 %320
        %v322 = vld [vmem:[%s4] sm:$0x1]
        %v324 = vlaneseq
        %v325 = vshrl.u32 %v324, 7
        %v326 = vsub.s32 0, %v325
        %v327 = vrot.slane %v322, %v326
        %329 = vbcast.lane.b32.xlu0 %v327, 256
        %v330 = vpop.permute.xlu0 %329
        %s332 = sor.u32 256, 8
        %333 = vbcast.lane.b32.xlu0 %v327, %s332
        %v334 = vpop.permute.xlu0 %333
        %s336 = sor.u32 256, 16
        %337 = vbcast.lane.b32.xlu0 %v327, %s336
        %v338 = vpop.permute.xlu0 %337
        %s340 = sor.u32 256, 24
        %341 = vbcast.lane.b32.xlu0 %v327, %s340
        %v342 = vpop.permute.xlu0 %341
        %v347 = vadd.f32 %v312, %v330
        %v348 = vadd.f32 %v315, %v334
        %v349 = vadd.f32 %v318, %v338
        %v350 = vadd.f32 %v321, %v342
        %v351 = vsub.f32 0.0, %v347
        %v352 = vsub.f32 0.0, %v348
        %v353 = vsub.f32 0.0, %v349
        %v354 = vsub.f32 0.0, %v350
        %v355 = vmul.f32 %v351, 1.442695
        %v356 = vpow.pop %v355
        %v357 = vmul.f32 %v352, 1.442695
        %v358 = vpow.pop %v357
        %v359 = vmul.f32 %v353, 1.442695
        %v360 = vpow.pop %v359
        %v361 = vmul.f32 %v354, 1.442695
        %v362 = vpow.pop %v361
        %v363 = vadd.f32 %v356, 1.0
        %v364 = vadd.f32 %v358, 1.0
        %v365 = vadd.f32 %v360, 1.0
        %v366 = vadd.f32 %v362, 1.0
        %v367 = vrcp.pop %v363
        %v368 = vmul.f32 1.0, %v367
        %v369 = vrcp.pop %v364
        %v370 = vmul.f32 1.0, %v369
        %v371 = vrcp.pop %v365
        %v372 = vmul.f32 1.0, %v371
        %v373 = vrcp.pop %v366
        %v374 = vmul.f32 1.0, %v373
        %376 = vset.pattern.permute.xlu0 0
        %377 = vperm.xlu0 %376, %v368
        %v378 = vpop.permute.xlu0 %377
        %381 = vset.pattern.permute.xlu0 0
        %382 = vperm.xlu0 %381, %v370
        %v383 = vpop.permute.xlu0 %382
        %386 = vset.pattern.permute.xlu0 0
        %387 = vperm.xlu0 %386, %v372
        %v388 = vpop.permute.xlu0 %387
        %391 = vset.pattern.permute.xlu0 0
        %392 = vperm.xlu0 %391, %v374
        %v393 = vpop.permute.xlu0 %392
        %v395 = vmul.f32 %v243, %v378
        %v396 = vmul.f32 %v244, %v378
        %v397 = vmul.f32 %v245, %v383
        %v398 = vmul.f32 %v246, %v383
        %v399 = vmul.f32 %v247, %v388
        %v400 = vmul.f32 %v248, %v388
        %v401 = vmul.f32 %v249, %v393
        %v402 = vmul.f32 %v250, %v393
        %403 = vst [vmem:[%s242] sm:$0xff] %v395
        %404 = vst [vmem:[%s242 + $0x8] sm:$0xff] %v396
        %405 = vst [vmem:[%s242 + $0x10] sm:$0xff] %v397
        %406 = vst [vmem:[%s242 + $0x18] sm:$0xff] %v398
        %407 = vst [vmem:[%s242 + $0x20] sm:$0xff] %v399
        %408 = vst [vmem:[%s242 + $0x28] sm:$0xff] %v400
        %409 = vst [vmem:[%s242 + $0x30] sm:$0xff] %v401
        %410 = vst [vmem:[%s242 + $0x38] sm:$0xff] %v402
        %s411 = sand.u32 %s140, 1
        %s412 = scalar_lea.sflag [#allocation4], %s411
        %s413 = sand.u32 %s140, 1
        %s414 = smul.addr %s413, 64
        %s415 = scalar_lea.vmem [#allocation5], %s414
        // Predicated region
        $region45: #{tpu_custom_call.1} parent=39 // pred_check
          %p416 = pneg %p150
        $region46: #{tpu_custom_call.1} parent=39 // pred_check_branch
          %418 = sbr.rel (%p416) target = $region48
        $region47: #{tpu_custom_call.1} parent=39 // pred_region
          %s420 = ssub.s32 1024, 1024
          %421 = vsyncadd %s412, %s420
          %s422 = smul.addr %s22, 8
          %s423 = smul.addr %s422, 128
          %s424 = scalar_lea.hbm %s5, %s423
          %s425 = sshll.u32 %s415, 4
          %s426 = int_to_ptr.vmem [resolvable:$true] %s425
          %431 = dma.vmem_to_hbm [thread:$0]  %s426, 1024, %s424, %s412, 256, 256, 16
        $region48: #{tpu_custom_call.1} parent=39 // pred_fallthru
          _
      $region40: #{tpu_custom_call.1} parent=5 // pred_fallthru
        _
      %p432 = scmp.le.s32.totalorder 2, %s17
      // Predicated region
      $region49: #{tpu_custom_call.1} parent=5 // pred_check
        %p433 = pneg %p432
      $region50: #{tpu_custom_call.1} parent=5 // pred_check_branch
        %435 = sbr.rel (%p433) target = $region52
      $region51: #{tpu_custom_call.1} parent=5 // pred_region
        %s436 = ssub.s32 %s17, 2
        // Predicated region
        $region53: #{tpu_custom_call.1} parent=51 // pred_check
          %p437 = pneg %p156
        $region54: #{tpu_custom_call.1} parent=51 // pred_check_branch
          %439 = sbr.rel (%p437) target = $region56
        $region55: #{tpu_custom_call.1} parent=51 // pred_region
          %s440 = sand.u32 %s141, 1
          %s441 = scalar_lea.sflag [#allocation4], %s440
          %s442 = sand.u32 %s141, 1
          %s443 = smul.addr %s442, 64
          %s444 = scalar_lea.vmem [#allocation5], %s443
          %445 = dma.done %s441, 1024
        $region56: #{tpu_custom_call.1} parent=51 // pred_fallthru
          _
      $region52: #{tpu_custom_call.1} parent=5 // pred_fallthru
        _
    $region6: #{tpu_custom_call.1} parent=1 // loop_footer
      %s21 = sadd.s32 1, %s17
    $region7: #{tpu_custom_call.1} parent=1 // loop_footer_branch
      %16 = sbr.rel target = $region3
    $region8: #{tpu_custom_call.1} parent=1 // loop_exit
      _
    %446 = vsyncpa [#allocation3], 1
    %s447 = scalar_lea.sflag [#allocation3], 1
    %448 = vsyncpa %s447, 1
    %449 = vsyncpa [#allocation4], 1
    %s450 = scalar_lea.sflag [#allocation4], 1
    %451 = vsyncpa %s450, 1

</llo_original>
